<compile_context>
chip_gen: v7x
topology: tpu7x:2x2x1
jax: 0.10.0
libtpu: 0.0.40
codegen_flags: <defaults>
</compile_context>

<pallas_src>
import jax
import jax.numpy as jnp
from jax.experimental import pallas as pl
from jax.experimental.pallas import tpu as pltpu

EPS = 1e-5


def _fused_kernel(x_ref, w_ref, b_ref, gamma_ref, beta_ref, out_ref):
    # x_ref: (C_in, M)   w_ref: (C_out, C_in)   b/gamma/beta: (C, 1)   out: (C, M)
    x = x_ref[...]
    w = w_ref[...]
    c_in = x.shape[0]

    # 1x1 conv == per-pixel channel matmul.  C is tiny, so unrolled VPU
    # broadcast-FMAs; use the MXU (jnp.dot) instead if M is generalized large.
    z = w[:, 0:1] * x[0:1, :]
    for ci in range(1, c_in):                   # static unroll (C_in == 6)
        z = z + w[:, ci:ci + 1] * x[ci:ci + 1, :]
    z = z + b_ref[...]                          # y2 = conv1x1(x) + bias

    # BatchNorm batch statistics (training mode), two-pass centered variance.
    inv_m = 1.0 / z.shape[1]
    mean = jnp.sum(z, axis=1, keepdims=True) * inv_m
    zc = z - mean
    var = jnp.sum(zc * zc, axis=1, keepdims=True) * inv_m
    inv_std = jax.lax.rsqrt(var + EPS)          # EUP slot, effectively free

    # Fold BN + residual into one per-channel affine:  out = y3 + y2 = s*z + t
    gamma = gamma_ref[...]
    s = 1.0 + gamma * inv_std
    t = beta_ref[...] - gamma * mean * inv_std
    out_ref[...] = (s * z + t).astype(out_ref.dtype)


def fused_conv1x1_bn_add(x_nchw, conv_w, conv_b, bn_gamma, bn_beta):
    """x_nchw: (N, C, H, W) f32, conv_w: (C_out, C_in, 1, 1). Returns y3 + y2 (NCHW)."""
    n, c, h, w = x_nchw.shape
    m = n * h * w

    # Channels -> sublanes, batch*spatial -> lanes (free reshape for N == 1).
    x_cm = jnp.transpose(x_nchw, (1, 0, 2, 3)).reshape(c, m)
    w_mat = conv_w[:, :, 0, 0].astype(jnp.float32)
    b_col = conv_b.reshape(c, 1).astype(jnp.float32)
    g_col = bn_gamma.reshape(c, 1).astype(jnp.float32)
    beta_col = bn_beta.reshape(c, 1).astype(jnp.float32)

    vmem = pltpu.MemorySpace.VMEM
    out_cm = pl.pallas_call(
        _fused_kernel,
        out_shape=jax.ShapeDtypeStruct((c, m), jnp.float32),
        in_specs=[pl.BlockSpec(memory_space=vmem)] * 5,
        out_specs=pl.BlockSpec(memory_space=vmem),
    )(x_cm, w_mat, b_col, g_col, beta_col)

    # (C, N*H*W) -> (N, C, H, W); free for N == 1.
    return jnp.transpose(out_cm.reshape(c, n, h, w), (1, 0, 2, 3))


if __name__ == "__main__":
    key = jax.random.PRNGKey(0)
    k_x, k_w, k_b = jax.random.split(key, 3)

    # Shapes implied by the module: x2 = torch.randn(1, 6, 6, 6)
    N, C, H, W = 1, 6, 6, 6
    x = jax.random.normal(k_x, (N, C, H, W), dtype=jnp.float32)

    # Deterministic synthetic params (shapes match Conv2d(6,6,1) / BatchNorm2d(6)).
    fan_in = C * 1 * 1
    bound = 1.0 / (fan_in ** 0.5)
    conv_w = jax.random.uniform(k_w, (C, C, 1, 1), jnp.float32, -bound, bound)
    conv_b = jax.random.uniform(k_b, (C,), jnp.float32, -bound, bound)
    bn_gamma = jnp.ones((C,), jnp.float32)
    bn_beta = jnp.zeros((C,), jnp.float32)
    # TODO(synk): BatchNorm running_mean/running_var buffer updates are not
    # emitted (they do not affect the returned forward value).

    fused = jax.jit(fused_conv1x1_bn_add)
    out = jax.block_until_ready(fused(x, conv_w, conv_b, bn_gamma, bn_beta))

    # Pure-JAX reference.
    w_mat = conv_w[:, :, 0, 0]
    y2 = jnp.einsum("oc,nchw->nohw", w_mat, x) + conv_b[None, :, None, None]
    mean = jnp.mean(y2, axis=(0, 2, 3), keepdims=True)
    var = jnp.mean((y2 - mean) ** 2, axis=(0, 2, 3), keepdims=True)
    y3 = (bn_gamma[None, :, None, None] * (y2 - mean) * jax.lax.rsqrt(var + EPS)
          + bn_beta[None, :, None, None])
    ref = y3 + y2

    assert out.shape == (N, C, H, W)
    assert jnp.allclose(out, ref, atol=1e-4, rtol=1e-4)
    print("KERNEL_OK")
</pallas_src>

<mosaic_0001>
module attributes {stable_mosaic.version = 11 : i64} {
  func.func @_fused_kernel(%arg0: memref<6x36xf32, #tpu.memory_space<vmem>>, %arg1: memref<6x6xf32, #tpu.memory_space<vmem>>, %arg2: memref<6x1xf32, #tpu.memory_space<vmem>>, %arg3: memref<6x1xf32, #tpu.memory_space<vmem>>, %arg4: memref<6x1xf32, #tpu.memory_space<vmem>>, %arg5: memref<6x36xf32, #tpu.memory_space<vmem>>) attributes {dimension_semantics = [], scalar_prefetch = 0 : i64, scratch_operands = 0 : i64, tpu.core_type = #tpu.core_type<tc>} {
    %c0 = arith.constant 0 : index
    %c0_0 = arith.constant 0 : index
    %0 = vector.load %arg0[%c0, %c0_0] : memref<6x36xf32, #tpu.memory_space<vmem>>, vector<6x36xf32>
    %c0_1 = arith.constant 0 : index
    %c0_2 = arith.constant 0 : index
    %1 = vector.load %arg1[%c0_1, %c0_2] : memref<6x6xf32, #tpu.memory_space<vmem>>, vector<6x6xf32>
    %2 = vector.extract_strided_slice %1 {offsets = [0, 0], sizes = [6, 1], strides = [1, 1]} : vector<6x6xf32> to vector<6x1xf32>
    %3 = vector.extract_strided_slice %0 {offsets = [0, 0], sizes = [1, 36], strides = [1, 1]} : vector<6x36xf32> to vector<1x36xf32>
    %4 = vector.broadcast %2 : vector<6x1xf32> to vector<6x36xf32>
    %5 = vector.broadcast %3 : vector<1x36xf32> to vector<6x36xf32>
    %6 = arith.mulf %4, %5 : vector<6x36xf32>
    %7 = vector.extract_strided_slice %1 {offsets = [0, 1], sizes = [6, 1], strides = [1, 1]} : vector<6x6xf32> to vector<6x1xf32>
    %8 = vector.extract_strided_slice %0 {offsets = [1, 0], sizes = [1, 36], strides = [1, 1]} : vector<6x36xf32> to vector<1x36xf32>
    %9 = vector.broadcast %7 : vector<6x1xf32> to vector<6x36xf32>
    %10 = vector.broadcast %8 : vector<1x36xf32> to vector<6x36xf32>
    %11 = arith.mulf %9, %10 : vector<6x36xf32>
    %12 = arith.addf %6, %11 : vector<6x36xf32>
    %13 = vector.extract_strided_slice %1 {offsets = [0, 2], sizes = [6, 1], strides = [1, 1]} : vector<6x6xf32> to vector<6x1xf32>
    %14 = vector.extract_strided_slice %0 {offsets = [2, 0], sizes = [1, 36], strides = [1, 1]} : vector<6x36xf32> to vector<1x36xf32>
    %15 = vector.broadcast %13 : vector<6x1xf32> to vector<6x36xf32>
    %16 = vector.broadcast %14 : vector<1x36xf32> to vector<6x36xf32>
    %17 = arith.mulf %15, %16 : vector<6x36xf32>
    %18 = arith.addf %12, %17 : vector<6x36xf32>
    %19 = vector.extract_strided_slice %1 {offsets = [0, 3], sizes = [6, 1], strides = [1, 1]} : vector<6x6xf32> to vector<6x1xf32>
    %20 = vector.extract_strided_slice %0 {offsets = [3, 0], sizes = [1, 36], strides = [1, 1]} : vector<6x36xf32> to vector<1x36xf32>
    %21 = vector.broadcast %19 : vector<6x1xf32> to vector<6x36xf32>
    %22 = vector.broadcast %20 : vector<1x36xf32> to vector<6x36xf32>
    %23 = arith.mulf %21, %22 : vector<6x36xf32>
    %24 = arith.addf %18, %23 : vector<6x36xf32>
    %25 = vector.extract_strided_slice %1 {offsets = [0, 4], sizes = [6, 1], strides = [1, 1]} : vector<6x6xf32> to vector<6x1xf32>
    %26 = vector.extract_strided_slice %0 {offsets = [4, 0], sizes = [1, 36], strides = [1, 1]} : vector<6x36xf32> to vector<1x36xf32>
    %27 = vector.broadcast %25 : vector<6x1xf32> to vector<6x36xf32>
    %28 = vector.broadcast %26 : vector<1x36xf32> to vector<6x36xf32>
    %29 = arith.mulf %27, %28 : vector<6x36xf32>
    %30 = arith.addf %24, %29 : vector<6x36xf32>
    %31 = vector.extract_strided_slice %1 {offsets = [0, 5], sizes = [6, 1], strides = [1, 1]} : vector<6x6xf32> to vector<6x1xf32>
    %32 = vector.extract_strided_slice %0 {offsets = [5, 0], sizes = [1, 36], strides = [1, 1]} : vector<6x36xf32> to vector<1x36xf32>
    %33 = vector.broadcast %31 : vector<6x1xf32> to vector<6x36xf32>
    %34 = vector.broadcast %32 : vector<1x36xf32> to vector<6x36xf32>
    %35 = arith.mulf %33, %34 : vector<6x36xf32>
    %36 = arith.addf %30, %35 : vector<6x36xf32>
    %c0_3 = arith.constant 0 : index
    %c0_4 = arith.constant 0 : index
    %37 = vector.load %arg2[%c0_3, %c0_4] : memref<6x1xf32, #tpu.memory_space<vmem>>, vector<6x1xf32>
    %38 = vector.broadcast %37 : vector<6x1xf32> to vector<6x36xf32>
    %39 = arith.addf %36, %38 : vector<6x36xf32>
    %cst = arith.constant dense<0.000000e+00> : vector<6xf32>
    %40 = vector.multi_reduction <add>, %39, %cst [1] : vector<6x36xf32> to vector<6xf32>
    %41 = vector.shape_cast %40 : vector<6xf32> to vector<6x1xf32>
    %cst_5 = arith.constant 0.027777778 : f32
    %42 = vector.broadcast %cst_5 : f32 to vector<6x1xf32>
    %43 = arith.mulf %41, %42 : vector<6x1xf32>
    %44 = vector.broadcast %43 : vector<6x1xf32> to vector<6x36xf32>
    %45 = arith.subf %39, %44 : vector<6x36xf32>
    %46 = arith.mulf %45, %45 : vector<6x36xf32>
    %cst_6 = arith.constant dense<0.000000e+00> : vector<6xf32>
    %47 = vector.multi_reduction <add>, %46, %cst_6 [1] : vector<6x36xf32> to vector<6xf32>
    %48 = vector.shape_cast %47 : vector<6xf32> to vector<6x1xf32>
    %cst_7 = arith.constant 0.027777778 : f32
    %49 = vector.broadcast %cst_7 : f32 to vector<6x1xf32>
    %50 = arith.mulf %48, %49 : vector<6x1xf32>
    %cst_8 = arith.constant 9.99999974E-6 : f32
    %51 = vector.broadcast %cst_8 : f32 to vector<6x1xf32>
    %52 = arith.addf %50, %51 : vector<6x1xf32>
    %53 = math.rsqrt %52 : vector<6x1xf32>
    %c0_9 = arith.constant 0 : index
    %c0_10 = arith.constant 0 : index
    %54 = vector.load %arg3[%c0_9, %c0_10] : memref<6x1xf32, #tpu.memory_space<vmem>>, vector<6x1xf32>
    %55 = arith.mulf %54, %53 : vector<6x1xf32>
    %cst_11 = arith.constant 1.000000e+00 : f32
    %56 = vector.broadcast %cst_11 : f32 to vector<6x1xf32>
    %57 = arith.addf %56, %55 : vector<6x1xf32>
    %c0_12 = arith.constant 0 : index
    %c0_13 = arith.constant 0 : index
    %58 = vector.load %arg4[%c0_12, %c0_13] : memref<6x1xf32, #tpu.memory_space<vmem>>, vector<6x1xf32>
    %59 = arith.mulf %54, %43 : vector<6x1xf32>
    %60 = arith.mulf %59, %53 : vector<6x1xf32>
    %61 = arith.subf %58, %60 : vector<6x1xf32>
    %62 = vector.broadcast %57 : vector<6x1xf32> to vector<6x36xf32>
    %63 = arith.mulf %62, %39 : vector<6x36xf32>
    %64 = vector.broadcast %61 : vector<6x1xf32> to vector<6x36xf32>
    %65 = arith.addf %63, %64 : vector<6x36xf32>
    %c0_14 = arith.constant 0 : index
    %c0_15 = arith.constant 0 : index
    %66 = vector.load %arg5[%c0_14, %c0_15] : memref<6x36xf32, #tpu.memory_space<vmem>>, vector<6x36xf32>
    tpu.vector_store %arg5[%c0_14, %c0_15], %65 {strides = array<i32>} : memref<6x36xf32, #tpu.memory_space<vmem>>, vector<6x36xf32>,
    return
  }
}

</mosaic_0001>

<llo_original>
// kernel: fused_conv1x1_bn_add.1
$region0: #{fused_conv1x1_bn_add.1}
  #allocation0 [shape = 'u32[]', space=smem, size = 0x4, offset = 0x4, fixed_abs, tag = 'smem constant byte address 0x4 - core index']
  #allocation1 [shape = 'u32[144,128]{1,0:T(1,128)}', space=vmem, size = 0x12000, scoped, tag = 'internal scratch']
  %s0 = inlined_call_operand.vmem [shape: f32[6,36], index: 0, kind: input, shape index: {}]
  %s1 = inlined_call_operand.vmem [shape: f32[6,6], index: 1, kind: input, shape index: {}]
  %s2 = inlined_call_operand.vmem [shape: f32[6,1], index: 2, kind: input, shape index: {}]
  %s3 = inlined_call_operand.vmem [shape: f32[6,1], index: 3, kind: input, shape index: {}]
  %s4 = inlined_call_operand.vmem [shape: f32[6,1], index: 4, kind: input, shape index: {}]
  %s5 = inlined_call_operand.vmem [shape: f32[6,36], index: 5, kind: output, shape index: {}]
  %s6 = sld [smem:[#allocation0]]
  $region30: #{fused_conv1x1_bn_add.1} parent=0
    _
  %s8 = ssub.s32 1, %s6
  %s9 = scalar_select 0, %s8, %s6
  // Predicated region
  $region2: #{fused_conv1x1_bn_add.1} parent=0 // pred_check
    _
  $region3: #{fused_conv1x1_bn_add.1} parent=0 // pred_check_branch
    %11 = sbr.rel (0) target = $region5
  $region4: #{fused_conv1x1_bn_add.1} parent=0 // pred_region
    _
  $region5: #{fused_conv1x1_bn_add.1} parent=0 // pred_fallthru
    _
  // Predicated region
  $region6: #{fused_conv1x1_bn_add.1} parent=0 // pred_check
    _
  $region7: #{fused_conv1x1_bn_add.1} parent=0 // pred_check_branch
    %13 = sbr.rel (0) target = $region9
  $region8: #{fused_conv1x1_bn_add.1} parent=0 // pred_region
    _
  $region9: #{fused_conv1x1_bn_add.1} parent=0 // pred_fallthru
    _
  // Predicated region
  $region10: #{fused_conv1x1_bn_add.1} parent=0 // pred_check
    _
  $region11: #{fused_conv1x1_bn_add.1} parent=0 // pred_check_branch
    %15 = sbr.rel (0) target = $region13
  $region12: #{fused_conv1x1_bn_add.1} parent=0 // pred_region
    _
  $region13: #{fused_conv1x1_bn_add.1} parent=0 // pred_fallthru
    _
  // Predicated region
  $region14: #{fused_conv1x1_bn_add.1} parent=0 // pred_check
    _
  $region15: #{fused_conv1x1_bn_add.1} parent=0 // pred_check_branch
    %17 = sbr.rel (0) target = $region17
  $region16: #{fused_conv1x1_bn_add.1} parent=0 // pred_region
    _
  $region17: #{fused_conv1x1_bn_add.1} parent=0 // pred_fallthru
    _
  // Predicated region
  $region18: #{fused_conv1x1_bn_add.1} parent=0 // pred_check
    _
  $region19: #{fused_conv1x1_bn_add.1} parent=0 // pred_check_branch
    %19 = sbr.rel (0) target = $region21
  $region20: #{fused_conv1x1_bn_add.1} parent=0 // pred_region
    _
  $region21: #{fused_conv1x1_bn_add.1} parent=0 // pred_fallthru
    _
  %v20 = vld [vmem:[%s0] sm:$0x3f]
  %v21 = vld [vmem:[%s1] sm:$0x3f]
  %23 = vset.pattern.permute.xlu0 0
  %24 = vperm.xlu0 %23, %v21
  %v25 = vpop.permute.xlu0 %24
  %v27 = vlaneseq
  %v28 = vshrl.u32 %v27, 7
  %v29 = vsub.s32 0, %v28
  %v30 = vrot.slane %v20, %v29
  %v31 = vmul.f32 %v25, %v30
  %32 = vset.pattern.permute.xlu0 1
  %33 = vperm.xlu0 %32, %v21
  %v34 = vpop.permute.xlu0 %33
  %v36 = vlaneseq
  %v37 = vshrl.u32 %v36, 7
  %v38 = vsub.s32 1, %v37
  %v39 = vrot.slane %v20, %v38
  %v40 = vmul.f32 %v34, %v39
  %v41 = vadd.f32 %v31, %v40
  %42 = vset.pattern.permute.xlu0 2
  %43 = vperm.xlu0 %42, %v21
  %v44 = vpop.permute.xlu0 %43
  %v46 = vlaneseq
  %v47 = vshrl.u32 %v46, 7
  %v48 = vsub.s32 2, %v47
  %v49 = vrot.slane %v20, %v48
  %v50 = vmul.f32 %v44, %v49
  %v51 = vadd.f32 %v41, %v50
  %52 = vset.pattern.permute.xlu0 3
  %53 = vperm.xlu0 %52, %v21
  %v54 = vpop.permute.xlu0 %53
  %v56 = vlaneseq
  %v57 = vshrl.u32 %v56, 7
  %v58 = vsub.s32 3, %v57
  %v59 = vrot.slane %v20, %v58
  %v60 = vmul.f32 %v54, %v59
  %v61 = vadd.f32 %v51, %v60
  %62 = vset.pattern.permute.xlu0 4
  %63 = vperm.xlu0 %62, %v21
  %v64 = vpop.permute.xlu0 %63
  %v66 = vlaneseq
  %v67 = vshrl.u32 %v66, 7
  %v68 = vsub.s32 4, %v67
  %v69 = vrot.slane %v20, %v68
  %v70 = vmul.f32 %v64, %v69
  %v71 = vadd.f32 %v61, %v70
  %72 = vset.pattern.permute.xlu0 5
  %73 = vperm.xlu0 %72, %v21
  %v74 = vpop.permute.xlu0 %73
  %v76 = vlaneseq
  %v77 = vshrl.u32 %v76, 7
  %v78 = vsub.s32 5, %v77
  %v79 = vrot.slane %v20, %v78
  %v80 = vmul.f32 %v74, %v79
  %v81 = vadd.f32 %v71, %v80
  %v82 = vld [vmem:[%s2] sm:$0x3f]
  %84 = vset.pattern.permute.xlu0 0
  %85 = vperm.xlu0 %84, %v82
  %v86 = vpop.permute.xlu0 %85
  %v88 = vadd.f32 %v81, %v86
  %vm89 = vcmask 291840
  %v90 = vsel %vm89, %v88, 0.0
  %91 = vadd.xlane.f32.xlu0 %v90
  %v92 = vpop.xlane.xlu0 %91
  %v93 = vmul.f32 %v92, 0.027777778
  %v94 = vsub.f32 %v88, %v93
  %v95 = vmul.f32 %v94, %v94
  %v96 = vsel %vm89, %v95, 0.0
  %97 = vadd.xlane.f32.xlu0 %v96
  %v98 = vpop.xlane.xlu0 %97
  %v99 = vmul.f32 %v98, 0.027777778
  %v100 = vadd.f32 %v99, 1e-05
  %v101 = vrsqrt.pop %v100
  %v102 = vld [vmem:[%s3] sm:$0x3f]
  %v103 = vmul.f32 %v102, %v101
  %v104 = vadd.f32 %v103, 1.0
  %v105 = vld [vmem:[%s4] sm:$0x3f]
  %v106 = vmul.f32 %v102, %v93
  %v107 = vmul.f32 %v106, %v101
  %v108 = vsub.f32 %v105, %v107
  %110 = vset.pattern.permute.xlu0 0
  %111 = vperm.xlu0 %110, %v104
  %v112 = vpop.permute.xlu0 %111
  %v114 = vmul.f32 %v112, %v88
  %116 = vset.pattern.permute.xlu0 0
  %117 = vperm.xlu0 %116, %v108
  %v118 = vpop.permute.xlu0 %117
  %v120 = vadd.f32 %v114, %v118
  %121 = vst.msk [vmem:[%s5] sm:$0x3f] %vm89, %v120
  // Predicated region
  $region22: #{fused_conv1x1_bn_add.1} parent=0 // pred_check
    _
  $region23: #{fused_conv1x1_bn_add.1} parent=0 // pred_check_branch
    %123 = sbr.rel (0) target = $region25
  $region24: #{fused_conv1x1_bn_add.1} parent=0 // pred_region
    _
  $region25: #{fused_conv1x1_bn_add.1} parent=0 // pred_fallthru
    _
  // Predicated region
  $region26: #{fused_conv1x1_bn_add.1} parent=0 // pred_check
    _
  $region27: #{fused_conv1x1_bn_add.1} parent=0 // pred_check_branch
    %125 = sbr.rel (0) target = $region29
  $region28: #{fused_conv1x1_bn_add.1} parent=0 // pred_region
    _
  $region29: #{fused_conv1x1_bn_add.1} parent=0 // pred_fallthru
    _

</llo_original>
